<compile_context>
chip_gen: v7x
topology: tpu7x:2x2x1
jax: 0.10.0
libtpu: 0.0.40
codegen_flags: <defaults>
</compile_context>

<pallas_src>
import functools
import math

import jax
import jax.numpy as jnp
from jax.experimental import pallas as pl
from jax.experimental.pallas import tpu as pltpu

_TILE_TARGET_BYTES = 8 * 1024 * 1024    # ~8 MiB row tiles (good on v5e/v6e/v7x)
_VMEM_LIMIT_BYTES = 48 * 1024 * 1024    # 2x(in)+2x(out) 8 MiB buffers fit; < v7x 64 MiB
_FUSED_F32_BYTES_MAX = 6 * 1024 * 1024  # fused path when f32 footprint of x <= this
_STATS_SHARDS = 2                       # 'parallel' stats shards (v7x has 2 TCs)


# ----------------------------------------------------------------------------
# Kernels
# ----------------------------------------------------------------------------
def _bn_fused_kernel(x_ref, gamma_ref, beta_ref, o_ref, *, inv_n, eps, d, g):
    """Single-call path: stats + normalize with the whole slab resident in VMEM."""
    xf = x_ref[...].astype(jnp.float32)                 # (rows, g*d)
    s = jnp.sum(xf, axis=0, keepdims=True)              # per-lane partial sums
    sq = jnp.sum(xf * xf, axis=0, keepdims=True)
    if g > 1:
        # Fold the g lane replicas of each channel (lane j -> channel j % d) and
        # re-broadcast with one small MXU matmul (avoids lane-hostile reshapes).
        gd = g * d
        ci = jax.lax.broadcasted_iota(jnp.int32, (gd, gd), 0) % d
        cj = jax.lax.broadcasted_iota(jnp.int32, (gd, gd), 1) % d
        fold = (ci == cj).astype(jnp.float32)            # segment all-reduce
        s = jnp.dot(s, fold, preferred_element_type=jnp.float32)
        sq = jnp.dot(sq, fold, preferred_element_type=jnp.float32)
    mean = s * inv_n
    # NOTE: E[x^2]-mean^2 (clamped) matches the usual BN formulation; f32 accum.
    var = jnp.maximum(sq * inv_n - mean * mean, 0.0)     # biased variance
    inv_std = jax.lax.rsqrt(var + eps)                   # EUP slot
    scale = gamma_ref[...] * inv_std
    shift = beta_ref[...] - mean * scale
    o_ref[...] = (xf * scale + shift).astype(o_ref.dtype)


def _bn_stats_kernel(x_ref, sum_ref, sq_ref, *, tile, n_rows, tiles_per_shard,
                     needs_mask):
    """Pass 1: per-shard per-lane sum / sum-of-squares accumulated into the
    resident (1, g*d) output block across the 'arbitrary' tile axis."""
    i = pl.program_id(1)

    @pl.when(i == 0)
    def _init():
        sum_ref[...] = jnp.zeros_like(sum_ref)
        sq_ref[...] = jnp.zeros_like(sq_ref)

    xf = x_ref[...].astype(jnp.float32)                  # (tile, g*d)
    if needs_mask:
        # Ragged tail: zero out padded rows of the last (partial) tile.
        t = pl.program_id(0) * tiles_per_shard + i
        rows_left = n_rows - t * tile
        row_ids = jax.lax.broadcasted_iota(jnp.int32, xf.shape, 0)
        xf = jnp.where(row_ids < rows_left, xf, 0.0)

    sum_ref[...] += jnp.sum(xf, axis=0, keepdims=True)
    sq_ref[...] += jnp.sum(xf * xf, axis=0, keepdims=True)


def _bn_apply_kernel(x_ref, scale_ref, shift_ref, o_ref):
    """Pass 2: out = x * scale + shift (math in f32, store in x.dtype)."""
    xf = x_ref[...].astype(jnp.float32)
    o_ref[...] = (xf * scale_ref[...] + shift_ref[...]).astype(o_ref.dtype)


# ----------------------------------------------------------------------------
# Tiling helper
# ----------------------------------------------------------------------------
def _pick_tile_rows(n_rows, row_bytes, target_bytes=_TILE_TARGET_BYTES):
    """Sublane-aligned (multiple-of-8) row tile near `target_bytes`, preferring
    an even tile count so 'parallel' grid axes split evenly across both v7x
    TensorCores. Ragged tails are handled by masking, not by a giant block."""
    if n_rows <= 8:
        return n_rows                                    # single full-extent block
    max_aligned = n_rows if n_rows % 8 == 0 else (n_rows // 8) * 8
    cap = (target_bytes // max(row_bytes, 1)) // 8 * 8
    tile = max(8, min(cap, max_aligned))
    n_tiles = pl.cdiv(n_rows, tile)
    if n_tiles == 1:
        # Small slab: split in two so both cores get work on the apply pass.
        tile = min(max_aligned, max(8, ((pl.cdiv(n_rows, 2) + 7) // 8) * 8))
        n_tiles = pl.cdiv(n_rows, tile)
    if n_tiles > 1 and n_tiles % 2 == 1:
        alt = min(max_aligned, max(8, ((pl.cdiv(n_rows, n_tiles + 1) + 7) // 8) * 8))
        if pl.cdiv(n_rows, alt) % 2 == 0:
            tile = alt
    return tile


# ----------------------------------------------------------------------------
# Forward
# ----------------------------------------------------------------------------
def bn1d_forward(x, gamma, beta, eps=1e-5, *, fused_bytes_max=_FUSED_F32_BYTES_MAX):
    """Training-mode BN1D forward. x: (B, L, D) or (B, D); gamma/beta: (D,)."""
    orig_shape = x.shape
    if x.ndim == 3:
        b, l, d = x.shape
        n_rows = b * l
    elif x.ndim == 2:
        n_rows, d = x.shape
    else:
        raise ValueError("BN1D expects a 2D or 3D input")

    # Lane-density fold: move g rows into the lane axis when D < 128.
    g_max = 128 // d if (d < 128 and 128 % d == 0) else 1
    g = math.gcd(n_rows, g_max)
    gd = g * d
    n_rows_f = n_rows // g

    x2 = x.reshape(n_rows_f, gd)              # contiguous row-major reshape (free)
    gamma32 = gamma.astype(jnp.float32).reshape(d)
    beta32 = beta.astype(jnp.float32).reshape(d)

    itemsize = x2.dtype.itemsize
    eps = float(eps)
    inv_n = 1.0 / float(n_rows)

    # ---- fused single-call fast path (slab fits comfortably in VMEM) --------
    if n_rows_f * gd * 4 <= fused_bytes_max:
        gamma_f = jnp.tile(gamma32, g).reshape(1, gd)
        beta_f = jnp.tile(beta32, g).reshape(1, gd)
        fused = functools.partial(_bn_fused_kernel, inv_n=inv_n, eps=eps, d=d, g=g)
        vmem_spec = pl.BlockSpec(memory_space=pltpu.MemorySpace.VMEM)
        out2 = pl.pallas_call(
            fused,
            out_shape=jax.ShapeDtypeStruct((n_rows_f, gd), x2.dtype),
            in_specs=[vmem_spec, vmem_spec, vmem_spec],
            out_specs=vmem_spec,
            compiler_params=pltpu.CompilerParams(
                vmem_limit_bytes=_VMEM_LIMIT_BYTES),
            cost_estimate=pl.CostEstimate(
                flops=5 * n_rows_f * gd + 4 * gd * gd,
                transcendentals=gd,
                bytes_accessed=2 * n_rows_f * gd * itemsize + 2 * gd * 4),
        )(x2, gamma_f, beta_f)
        return out2.reshape(orig_shape)

    # ---- streaming two-pass path ---------------------------------------------
    tile = _pick_tile_rows(n_rows_f, gd * itemsize)
    n_tiles = pl.cdiv(n_rows_f, tile)
    needs_mask = (n_rows_f % tile) != 0
    num_shards = (_STATS_SHARDS
                  if (n_tiles >= _STATS_SHARDS and n_tiles % _STATS_SHARDS == 0)
                  else 1)
    tiles_per_shard = n_tiles // num_shards

    # pass 1: per-shard partial per-lane sum / sum-of-squares
    stats_kernel = functools.partial(
        _bn_stats_kernel, tile=tile, n_rows=n_rows_f,
        tiles_per_shard=tiles_per_shard, needs_mask=needs_mask)
    sum_p, sq_p = pl.pallas_call(
        stats_kernel,
        out_shape=(jax.ShapeDtypeStruct((num_shards, 1, gd), jnp.float32),
                   jax.ShapeDtypeStruct((num_shards, 1, gd), jnp.float32)),
        grid_spec=pltpu.PrefetchScalarGridSpec(
            num_scalar_prefetch=0,
            grid=(num_shards, tiles_per_shard),
            in_specs=[pl.BlockSpec(
                (tile, gd), lambda c, i: (c * tiles_per_shard + i, 0))],
            out_specs=(pl.BlockSpec((None, 1, gd), lambda c, i: (c, 0, 0)),
                       pl.BlockSpec((None, 1, gd), lambda c, i: (c, 0, 0))),
        ),
        compiler_params=pltpu.CompilerParams(
            dimension_semantics=("parallel", "arbitrary"),
            vmem_limit_bytes=_VMEM_LIMIT_BYTES),
        cost_estimate=pl.CostEstimate(
            flops=3 * n_rows_f * gd,
            transcendentals=0,
            bytes_accessed=n_rows_f * gd * itemsize + 2 * num_shards * gd * 4),
    )(x2)

    # Tiny finalize on D-length vectors (host-side XLA ops, negligible cost).
    sum_tot = jnp.sum(sum_p, axis=0).reshape(gd)     # fold shard partials
    sq_tot = jnp.sum(sq_p, axis=0).reshape(gd)
    if g > 1:
        sum_tot = sum_tot.reshape(g, d).sum(axis=0)  # fold lane replicas -> (d,)
        sq_tot = sq_tot.reshape(g, d).sum(axis=0)
    mean = sum_tot * inv_n
    var = jnp.maximum(sq_tot * inv_n - mean * mean, 0.0)   # biased variance
    inv_std = jax.lax.rsqrt(var + eps)
    scale_c = gamma32 * inv_std
    shift_c = beta32 - mean * scale_c
    scale_f = jnp.tile(scale_c, g).reshape(1, gd)
    shift_f = jnp.tile(shift_c, g).reshape(1, gd)

    # pass 2: streamed normalize-and-affine
    out2 = pl.pallas_call(
        _bn_apply_kernel,
        out_shape=jax.ShapeDtypeStruct((n_rows_f, gd), x2.dtype),
        grid_spec=pltpu.PrefetchScalarGridSpec(
            num_scalar_prefetch=0,
            grid=(n_tiles,),
            in_specs=[pl.BlockSpec((tile, gd), lambda i: (i, 0)),
                      pl.BlockSpec((1, gd), lambda i: (0, 0)),
                      pl.BlockSpec((1, gd), lambda i: (0, 0))],
            out_specs=pl.BlockSpec((tile, gd), lambda i: (i, 0)),
        ),
        compiler_params=pltpu.CompilerParams(
            dimension_semantics=("parallel",),
            vmem_limit_bytes=_VMEM_LIMIT_BYTES),
        cost_estimate=pl.CostEstimate(
            flops=2 * n_rows_f * gd,
            transcendentals=0,
            bytes_accessed=2 * n_rows_f * gd * itemsize + 2 * gd * 4),
    )(x2, scale_f, shift_f)

    return out2.reshape(orig_shape)


def bn1d_ref(x, gamma, beta, eps=1e-5):
    """Pure-JAX reference matching PyTorch BN1D.forward in training mode."""
    reduce_axes = tuple(range(x.ndim - 1))               # all dims except channels
    mean = jnp.mean(x, axis=reduce_axes)
    var = jnp.mean(jnp.square(x - mean), axis=reduce_axes)   # biased variance
    return (x - mean) * jax.lax.rsqrt(var + eps) * gamma + beta


if __name__ == "__main__":
    key = jax.random.PRNGKey(0)
    kx, kg, kb, kx2, kx3, kx4 = jax.random.split(key, 6)

    D = 16
    gamma = 1.0 + 0.1 * jax.random.normal(kg, (D,), dtype=jnp.float32)
    beta = 0.1 * jax.random.normal(kb, (D,), dtype=jnp.float32)

    # 3D path (B, L, D): lane-folded (g=8), fused single-call fast path.
    x3d = jax.random.normal(kx, (4, 32, D), dtype=jnp.float32)
    out = jax.block_until_ready(bn1d_forward(x3d, gamma, beta))
    ref = bn1d_ref(x3d, gamma, beta)
    assert out.shape == x3d.shape
    assert jnp.allclose(out, ref, atol=1e-4, rtol=1e-4), "3D fused mismatch"

    # 2D path (B, D): statistics over the batch axis.
    x2d = jax.random.normal(kx2, (8, D), dtype=jnp.float32)
    out2 = jax.block_until_ready(bn1d_forward(x2d, gamma, beta))
    ref2 = bn1d_ref(x2d, gamma, beta)
    assert out2.shape == x2d.shape
    assert jnp.allclose(out2, ref2, atol=1e-4, rtol=1e-4), "2D fused mismatch"

    # Streaming two-pass path (fused fast path disabled to exercise it).
    x_big = jax.random.normal(kx3, (4, 96, D), dtype=jnp.float32)
    out3 = jax.block_until_ready(bn1d_forward(x_big, gamma, beta, fused_bytes_max=0))
    ref3 = bn1d_ref(x_big, gamma, beta)
    assert jnp.allclose(out3, ref3, atol=1e-4, rtol=1e-4), "streaming mismatch"

    # Ragged rows + non-foldable channel count (48 does not divide 128).
    D2 = 48
    g2 = 1.0 + 0.1 * jax.random.normal(kg, (D2,), dtype=jnp.float32)
    b2 = 0.1 * jax.random.normal(kb, (D2,), dtype=jnp.float32)
    x_rag = jax.random.normal(kx4, (10, D2), dtype=jnp.float32)
    out4 = jax.block_until_ready(bn1d_forward(x_rag, g2, b2, fused_bytes_max=0))
    ref4 = bn1d_ref(x_rag, g2, b2)
    assert jnp.allclose(out4, ref4, atol=1e-4, rtol=1e-4), "ragged streaming mismatch"

    print("KERNEL_OK")
</pallas_src>

<mosaic_0001>
module attributes {stable_mosaic.version = 11 : i64} {
  func.func @_bn_fused_kernel(%arg0: memref<16x128xf32, #tpu.memory_space<vmem>>, %arg1: memref<1x128xf32, #tpu.memory_space<vmem>>, %arg2: memref<1x128xf32, #tpu.memory_space<vmem>>, %arg3: memref<16x128xf32, #tpu.memory_space<vmem>>) attributes {dimension_semantics = [], scalar_prefetch = 0 : i64, scratch_operands = 0 : i64, tpu.core_type = #tpu.core_type<tc>} {
    %c0 = arith.constant 0 : index
    %c0_0 = arith.constant 0 : index
    %0 = vector.load %arg0[%c0, %c0_0] : memref<16x128xf32, #tpu.memory_space<vmem>>, vector<16x128xf32>
    %cst = arith.constant dense<0.000000e+00> : vector<128xf32>
    %1 = vector.multi_reduction <add>, %0, %cst [0] : vector<16x128xf32> to vector<128xf32>
    %2 = vector.shape_cast %1 : vector<128xf32> to vector<1x128xf32>
    %3 = arith.mulf %0, %0 : vector<16x128xf32>
    %cst_1 = arith.constant dense<0.000000e+00> : vector<128xf32>
    %4 = vector.multi_reduction <add>, %3, %cst_1 [0] : vector<16x128xf32> to vector<128xf32>
    %5 = vector.shape_cast %4 : vector<128xf32> to vector<1x128xf32>
    %6 = tpu.iota {dimensions = array<i32: 0>} : vector<128x128xi32>
    %c16_i32 = arith.constant 16 : i32
    %c0_i32 = arith.constant 0 : i32
    %7 = arith.cmpi eq, %c16_i32, %c0_i32 : i32
    %c1_i32 = arith.constant 1 : i32
    %8 = arith.select %7, %c1_i32, %c16_i32 : i32
    %9 = vector.broadcast %8 : i32 to vector<128x128xi32>
    %10 = arith.remsi %6, %9 : vector<128x128xi32>
    %c0_i32_2 = arith.constant 0 : i32
    %11 = vector.broadcast %c0_i32_2 : i32 to vector<128x128xi32>
    %12 = arith.cmpi ne, %10, %11 : vector<128x128xi32>
    %c0_i32_3 = arith.constant 0 : i32
    %13 = vector.broadcast %c0_i32_3 : i32 to vector<128x128xi32>
    %14 = arith.cmpi slt, %10, %13 : vector<128x128xi32>
    %c0_i32_4 = arith.constant 0 : i32
    %15 = arith.cmpi slt, %8, %c0_i32_4 : i32
    %16 = vector.broadcast %15 : i1 to vector<128x128xi1>
    %17 = vector.broadcast %16 : vector<128x128xi1> to vector<128x128xi1>
    %18 = arith.xori %14, %17 : vector<128x128xi1>
    %19 = arith.andi %18, %12 : vector<128x128xi1>
    %20 = vector.broadcast %8 : i32 to vector<128x128xi32>
    %21 = arith.addi %10, %20 : vector<128x128xi32>
    %22 = arith.select %19, %21, %10 : vector<128x128xi1>, vector<128x128xi32>
    %23 = tpu.iota {dimensions = array<i32: 1>} : vector<128x128xi32>
    %c16_i32_5 = arith.constant 16 : i32
    %c0_i32_6 = arith.constant 0 : i32
    %24 = arith.cmpi eq, %c16_i32_5, %c0_i32_6 : i32
    %c1_i32_7 = arith.constant 1 : i32
    %25 = arith.select %24, %c1_i32_7, %c16_i32_5 : i32
    %26 = vector.broadcast %25 : i32 to vector<128x128xi32>
    %27 = arith.remsi %23, %26 : vector<128x128xi32>
    %c0_i32_8 = arith.constant 0 : i32
    %28 = vector.broadcast %c0_i32_8 : i32 to vector<128x128xi32>
    %29 = arith.cmpi ne, %27, %28 : vector<128x128xi32>
    %c0_i32_9 = arith.constant 0 : i32
    %30 = vector.broadcast %c0_i32_9 : i32 to vector<128x128xi32>
    %31 = arith.cmpi slt, %27, %30 : vector<128x128xi32>
    %c0_i32_10 = arith.constant 0 : i32
    %32 = arith.cmpi slt, %25, %c0_i32_10 : i32
    %33 = vector.broadcast %32 : i1 to vector<128x128xi1>
    %34 = vector.broadcast %33 : vector<128x128xi1> to vector<128x128xi1>
    %35 = arith.xori %31, %34 : vector<128x128xi1>
    %36 = arith.andi %35, %29 : vector<128x128xi1>
    %37 = vector.broadcast %25 : i32 to vector<128x128xi32>
    %38 = arith.addi %27, %37 : vector<128x128xi32>
    %39 = arith.select %36, %38, %27 : vector<128x128xi1>, vector<128x128xi32>
    %40 = arith.cmpi eq, %22, %39 : vector<128x128xi32>
    %41 = arith.extui %40 : vector<128x128xi1> to vector<128x128xi32>
    %42 = arith.sitofp %41 : vector<128x128xi32> to vector<128x128xf32>
    %cst_11 = arith.constant dense<0.000000e+00> : vector<1x128xf32>
    %43 = tpu.matmul %2, %42, %cst_11 {dimension_numbers = #tpu.dot_dimension_numbers<[1], [0], [0], [1], [0, 0, 1, 1], [], []>} : vector<1x128xf32>, vector<128x128xf32>, vector<1x128xf32> -> vector<1x128xf32>
    %cst_12 = arith.constant dense<0.000000e+00> : vector<1x128xf32>
    %44 = tpu.matmul %5, %42, %cst_12 {dimension_numbers = #tpu.dot_dimension_numbers<[1], [0], [0], [1], [0, 0, 1, 1], [], []>} : vector<1x128xf32>, vector<128x128xf32>, vector<1x128xf32> -> vector<1x128xf32>
    %cst_13 = arith.constant 7.812500e-03 : f32
    %45 = vector.broadcast %cst_13 : f32 to vector<1x128xf32>
    %46 = arith.mulf %43, %45 : vector<1x128xf32>
    %cst_14 = arith.constant 7.812500e-03 : f32
    %47 = vector.broadcast %cst_14 : f32 to vector<1x128xf32>
    %48 = arith.mulf %44, %47 : vector<1x128xf32>
    %49 = arith.mulf %46, %46 : vector<1x128xf32>
    %50 = arith.subf %48, %49 : vector<1x128xf32>
    %cst_15 = arith.constant 0.000000e+00 : f32
    %51 = vector.broadcast %cst_15 : f32 to vector<1x128xf32>
    %52 = arith.maximumf %50, %51 : vector<1x128xf32>
    %cst_16 = arith.constant 9.99999974E-6 : f32
    %53 = vector.broadcast %cst_16 : f32 to vector<1x128xf32>
    %54 = arith.addf %52, %53 : vector<1x128xf32>
    %55 = math.rsqrt %54 : vector<1x128xf32>
    %c0_17 = arith.constant 0 : index
    %c0_18 = arith.constant 0 : index
    %56 = vector.load %arg1[%c0_17, %c0_18] : memref<1x128xf32, #tpu.memory_space<vmem>>, vector<1x128xf32>
    %57 = arith.mulf %56, %55 : vector<1x128xf32>
    %c0_19 = arith.constant 0 : index
    %c0_20 = arith.constant 0 : index
    %58 = vector.load %arg2[%c0_19, %c0_20] : memref<1x128xf32, #tpu.memory_space<vmem>>, vector<1x128xf32>
    %59 = arith.mulf %46, %57 : vector<1x128xf32>
    %60 = arith.subf %58, %59 : vector<1x128xf32>
    %61 = vector.broadcast %57 : vector<1x128xf32> to vector<16x128xf32>
    %62 = arith.mulf %0, %61 : vector<16x128xf32>
    %63 = vector.broadcast %60 : vector<1x128xf32> to vector<16x128xf32>
    %64 = arith.addf %62, %63 : vector<16x128xf32>
    %c0_21 = arith.constant 0 : index
    %c0_22 = arith.constant 0 : index
    %65 = vector.load %arg3[%c0_21, %c0_22] : memref<16x128xf32, #tpu.memory_space<vmem>>, vector<16x128xf32>
    tpu.vector_store %arg3[%c0_21, %c0_22], %64 {strides = array<i32>} : memref<16x128xf32, #tpu.memory_space<vmem>>, vector<16x128xf32>,
    return
  }
}

</mosaic_0001>

<llo_original>
// kernel: tpu_custom_call.1
$region0: #{tpu_custom_call.1}
  #allocation0 [shape = 'u32[]', space=smem, size = 0x4, offset = 0x4, fixed_abs, tag = 'smem constant byte address 0x4 - core index']
  #allocation1 [shape = 'u32[144,128]{1,0:T(1,128)}', space=vmem, size = 0x12000, scoped, tag = 'internal scratch']
  %s0 = inlined_call_operand.hbm [shape: f32[16,128], index: 0, kind: input, shape index: {}]
  %s1 = inlined_call_operand.vmem [shape: f32[1,128], index: 1, kind: input, shape index: {}]
  %s2 = inlined_call_operand.vmem [shape: f32[1,128], index: 2, kind: input, shape index: {}]
  %s3 = inlined_call_operand.hbm [shape: f32[16,128], index: 3, kind: output, shape index: {}]
  %s4 = sld [smem:[#allocation0]]
  $region26: #{tpu_custom_call.1} parent=0
    _
  %s6 = ssub.s32 1, %s4
  %s7 = scalar_select 0, %s6, %s4
  $region1: #{tpu_custom_call.1} parent=0
    #allocation2 [shape = 'u8[8192]{0}', space=vmem, size = 0x2000, scoped, tag = 'input window, operand 0, single buffered']
    #allocation3 [shape = 's32[1]{0}', space=sflag, size = 0x4, scoped, tag = 'scoped memory for tpu_custom_call.1']
    #allocation4 [shape = 's32[1]{0}', space=sflag, size = 0x4, scoped, tag = 'scoped memory for tpu_custom_call.1']
    #allocation5 [shape = 'u8[8192]{0}', space=vmem, size = 0x2000, scoped, tag = 'output window, operand 0, single buffered']
    %8 = vsyncpa [#allocation3], 0
    %9 = vsyncpa [#allocation4], 0
    // Predicated region
    $region2: #{tpu_custom_call.1} parent=1 // pred_check
      _
    $region3: #{tpu_custom_call.1} parent=1 // pred_check_branch
      %11 = sbr.rel (0) target = $region5
    $region4: #{tpu_custom_call.1} parent=1 // pred_region
      %s13 = ssub.s32 256, 256
      %14 = vsyncadd [#allocation3], %s13
      %s15 = sshll.u32 [#allocation2], 4
      %s16 = int_to_ptr.vmem [resolvable:$true] %s15
      %21 = dma.hbm_to_vmem [thread:$0]  %s0, 256, %s16, [#allocation3], 128, 128, 8
    $region5: #{tpu_custom_call.1} parent=1 // pred_fallthru
      _
    // Predicated region
    $region6: #{tpu_custom_call.1} parent=1 // pred_check
      _
    $region7: #{tpu_custom_call.1} parent=1 // pred_check_branch
      %23 = sbr.rel (0) target = $region9
    $region8: #{tpu_custom_call.1} parent=1 // pred_region
      _
    $region9: #{tpu_custom_call.1} parent=1 // pred_fallthru
      _
    // Predicated region
    $region10: #{tpu_custom_call.1} parent=1 // pred_check
      _
    $region11: #{tpu_custom_call.1} parent=1 // pred_check_branch
      %25 = sbr.rel (0) target = $region13
    $region12: #{tpu_custom_call.1} parent=1 // pred_region
      _
    $region13: #{tpu_custom_call.1} parent=1 // pred_fallthru
      _
    // Predicated region
    $region14: #{tpu_custom_call.1} parent=1 // pred_check
      _
    $region15: #{tpu_custom_call.1} parent=1 // pred_check_branch
      %27 = sbr.rel (0) target = $region17
    $region16: #{tpu_custom_call.1} parent=1 // pred_region
      %28 = dma.done [#allocation3], 256
    $region17: #{tpu_custom_call.1} parent=1 // pred_fallthru
      _
    %v29 = vld [vmem:[#allocation2] sm:$0xff]
    %v30 = vld [vmem:[#allocation2 + $0x8] sm:$0xff]
    %v31 = vadd.f32 %v29, %v30
    %v32 = vrot.slane %v31, 4
    %v33 = vadd.f32 %v31, %v32
    %v34 = vrot.slane %v33, 2
    %v35 = vadd.f32 %v33, %v34
    %v36 = vrot.slane %v35, 1
    %v37 = vadd.f32 %v35, %v36
    %v38 = vmul.f32 %v29, %v29
    %v39 = vmul.f32 %v30, %v30
    %v40 = vadd.f32 %v38, %v39
    %v41 = vrot.slane %v40, 4
    %v42 = vadd.f32 %v40, %v41
    %v43 = vrot.slane %v42, 2
    %v44 = vadd.f32 %v42, %v43
    %v45 = vrot.slane %v44, 1
    %v46 = vadd.f32 %v44, %v45
    %v47 = vlaneseq
    %v48 = vshrl.u32 %v47, 7
    %v49 = vadd.s32 %v48, 8
    %v50 = vadd.s32 %v48, 16
    %v51 = vadd.s32 %v48, 24
    %v52 = vadd.s32 %v48, 32
    %v53 = vadd.s32 %v48, 40
    %v54 = vadd.s32 %v48, 48
    %v55 = vadd.s32 %v48, 56
    %v56 = vadd.s32 %v48, 64
    %v57 = vadd.s32 %v48, 72
    %v58 = vadd.s32 %v48, 80
    %v59 = vadd.s32 %v48, 88
    %v60 = vadd.s32 %v48, 96
    %v61 = vadd.s32 %v48, 104
    %v62 = vadd.s32 %v48, 112
    %v63 = vadd.s32 %v48, 120
    %vm64 = vcmp.lt.s32.totalorder %v48, 0
    %v65 = vsub.s32 0, %v48
    %v66 = vsel %vm64, %v65, %v48
    %v67 = vshrl.u32 %v66, 4
    %v68 = vand.u32 %v66, 15
    %v69 = vsub.s32 0, %v68
    %v70 = vsel %vm64, %v69, %v68
    %vm71 = vcmp.lt.s32.totalorder %v49, 0
    %v72 = vsub.s32 0, %v49
    %v73 = vsel %vm71, %v72, %v49
    %v74 = vshrl.u32 %v73, 4
    %v75 = vand.u32 %v73, 15
    %v76 = vsub.s32 0, %v75
    %v77 = vsel %vm71, %v76, %v75
    %vm78 = vcmp.lt.s32.totalorder %v50, 0
    %v79 = vsub.s32 0, %v50
    %v80 = vsel %vm78, %v79, %v50
    %v81 = vshrl.u32 %v80, 4
    %v82 = vand.u32 %v80, 15
    %v83 = vsub.s32 0, %v82
    %v84 = vsel %vm78, %v83, %v82
    %vm85 = vcmp.lt.s32.totalorder %v51, 0
    %v86 = vsub.s32 0, %v51
    %v87 = vsel %vm85, %v86, %v51
    %v88 = vshrl.u32 %v87, 4
    %v89 = vand.u32 %v87, 15
    %v90 = vsub.s32 0, %v89
    %v91 = vsel %vm85, %v90, %v89
    %vm92 = vcmp.lt.s32.totalorder %v52, 0
    %v93 = vsub.s32 0, %v52
    %v94 = vsel %vm92, %v93, %v52
    %v95 = vshrl.u32 %v94, 4
    %v96 = vand.u32 %v94, 15
    %v97 = vsub.s32 0, %v96
    %v98 = vsel %vm92, %v97, %v96
    %vm99 = vcmp.lt.s32.totalorder %v53, 0
    %v100 = vsub.s32 0, %v53
    %v101 = vsel %vm99, %v100, %v53
    %v102 = vshrl.u32 %v101, 4
    %v103 = vand.u32 %v101, 15
    %v104 = vsub.s32 0, %v103
    %v105 = vsel %vm99, %v104, %v103
    %vm106 = vcmp.lt.s32.totalorder %v54, 0
    %v107 = vsub.s32 0, %v54
    %v108 = vsel %vm106, %v107, %v54
    %v109 = vshrl.u32 %v108, 4
    %v110 = vand.u32 %v108, 15
    %v111 = vsub.s32 0, %v110
    %v112 = vsel %vm106, %v111, %v110
    %vm113 = vcmp.lt.s32.totalorder %v55, 0
    %v114 = vsub.s32 0, %v55
    %v115 = vsel %vm113, %v114, %v55
    %v116 = vshrl.u32 %v115, 4
    %v117 = vand.u32 %v115, 15
    %v118 = vsub.s32 0, %v117
    %v119 = vsel %vm113, %v118, %v117
    %vm120 = vcmp.lt.s32.totalorder %v56, 0
    %v121 = vsub.s32 0, %v56
    %v122 = vsel %vm120, %v121, %v56
    %v123 = vshrl.u32 %v122, 4
    %v124 = vand.u32 %v122, 15
    %v125 = vsub.s32 0, %v124
    %v126 = vsel %vm120, %v125, %v124
    %vm127 = vcmp.lt.s32.totalorder %v57, 0
    %v128 = vsub.s32 0, %v57
    %v129 = vsel %vm127, %v128, %v57
    %v130 = vshrl.u32 %v129, 4
    %v131 = vand.u32 %v129, 15
    %v132 = vsub.s32 0, %v131
    %v133 = vsel %vm127, %v132, %v131
    %vm134 = vcmp.lt.s32.totalorder %v58, 0
    %v135 = vsub.s32 0, %v58
    %v136 = vsel %vm134, %v135, %v58
    %v137 = vshrl.u32 %v136, 4
    %v138 = vand.u32 %v136, 15
    %v139 = vsub.s32 0, %v138
    %v140 = vsel %vm134, %v139, %v138
    %vm141 = vcmp.lt.s32.totalorder %v59, 0
    %v142 = vsub.s32 0, %v59
    %v143 = vsel %vm141, %v142, %v59
    %v144 = vshrl.u32 %v143, 4
    %v145 = vand.u32 %v143, 15
    %v146 = vsub.s32 0, %v145
    %v147 = vsel %vm141, %v146, %v145
    %vm148 = vcmp.lt.s32.totalorder %v60, 0
    %v149 = vsub.s32 0, %v60
    %v150 = vsel %vm148, %v149, %v60
    %v151 = vshrl.u32 %v150, 4
    %v152 = vand.u32 %v150, 15
    %v153 = vsub.s32 0, %v152
    %v154 = vsel %vm148, %v153, %v152
    %vm155 = vcmp.lt.s32.totalorder %v61, 0
    %v156 = vsub.s32 0, %v61
    %v157 = vsel %vm155, %v156, %v61
    %v158 = vshrl.u32 %v157, 4
    %v159 = vand.u32 %v157, 15
    %v160 = vsub.s32 0, %v159
    %v161 = vsel %vm155, %v160, %v159
    %vm162 = vcmp.lt.s32.totalorder %v62, 0
    %v163 = vsub.s32 0, %v62
    %v164 = vsel %vm162, %v163, %v62
    %v165 = vshrl.u32 %v164, 4
    %v166 = vand.u32 %v164, 15
    %v167 = vsub.s32 0, %v166
    %v168 = vsel %vm162, %v167, %v166
    %vm169 = vcmp.lt.s32.totalorder %v63, 0
    %v170 = vsub.s32 0, %v63
    %v171 = vsel %vm169, %v170, %v63
    %v172 = vshrl.u32 %v171, 4
    %v173 = vand.u32 %v171, 15
    %v174 = vsub.s32 0, %v173
    %v175 = vsel %vm169, %v174, %v173
    %vm176 = vcmp.ne.s32.totalorder %v70, 0
    %vm177 = vcmp.ne.s32.totalorder %v77, 0
    %vm178 = vcmp.ne.s32.totalorder %v84, 0
    %vm179 = vcmp.ne.s32.totalorder %v91, 0
    %vm180 = vcmp.ne.s32.totalorder %v98, 0
    %vm181 = vcmp.ne.s32.totalorder %v105, 0
    %vm182 = vcmp.ne.s32.totalorder %v112, 0
    %vm183 = vcmp.ne.s32.totalorder %v119, 0
    %vm184 = vcmp.ne.s32.totalorder %v126, 0
    %vm185 = vcmp.ne.s32.totalorder %v133, 0
    %vm186 = vcmp.ne.s32.totalorder %v140, 0
    %vm187 = vcmp.ne.s32.totalorder %v147, 0
    %vm188 = vcmp.ne.s32.totalorder %v154, 0
    %vm189 = vcmp.ne.s32.totalorder %v161, 0
    %vm190 = vcmp.ne.s32.totalorder %v168, 0
    %vm191 = vcmp.ne.s32.totalorder %v175, 0
    %vm192 = vcmp.lt.s32.totalorder %v70, 0
    %vm193 = vcmp.lt.s32.totalorder %v77, 0
    %vm194 = vcmp.lt.s32.totalorder %v84, 0
    %vm195 = vcmp.lt.s32.totalorder %v91, 0
    %vm196 = vcmp.lt.s32.totalorder %v98, 0
    %vm197 = vcmp.lt.s32.totalorder %v105, 0
    %vm198 = vcmp.lt.s32.totalorder %v112, 0
    %vm199 = vcmp.lt.s32.totalorder %v119, 0
    %vm200 = vcmp.lt.s32.totalorder %v126, 0
    %vm201 = vcmp.lt.s32.totalorder %v133, 0
    %vm202 = vcmp.lt.s32.totalorder %v140, 0
    %vm203 = vcmp.lt.s32.totalorder %v147, 0
    %vm204 = vcmp.lt.s32.totalorder %v154, 0
    %vm205 = vcmp.lt.s32.totalorder %v161, 0
    %vm206 = vcmp.lt.s32.totalorder %v168, 0
    %vm207 = vcmp.lt.s32.totalorder %v175, 0
    %vm208 = vmand %vm192, %vm176
    %vm209 = vmand %vm193, %vm177
    %vm210 = vmand %vm194, %vm178
    %vm211 = vmand %vm195, %vm179
    %vm212 = vmand %vm196, %vm180
    %vm213 = vmand %vm197, %vm181
    %vm214 = vmand %vm198, %vm182
    %vm215 = vmand %vm199, %vm183
    %vm216 = vmand %vm200, %vm184
    %vm217 = vmand %vm201, %vm185
    %vm218 = vmand %vm202, %vm186
    %vm219 = vmand %vm203, %vm187
    %vm220 = vmand %vm204, %vm188
    %vm221 = vmand %vm205, %vm189
    %vm222 = vmand %vm206, %vm190
    %vm223 = vmand %vm207, %vm191
    %v224 = vadd.s32 %v70, 16
    %v225 = vadd.s32 %v77, 16
    %v226 = vadd.s32 %v84, 16
    %v227 = vadd.s32 %v91, 16
    %v228 = vadd.s32 %v98, 16
    %v229 = vadd.s32 %v105, 16
    %v230 = vadd.s32 %v112, 16
    %v231 = vadd.s32 %v119, 16
    %v232 = vadd.s32 %v126, 16
    %v233 = vadd.s32 %v133, 16
    %v234 = vadd.s32 %v140, 16
    %v235 = vadd.s32 %v147, 16
    %v236 = vadd.s32 %v154, 16
    %v237 = vadd.s32 %v161, 16
    %v238 = vadd.s32 %v168, 16
    %v239 = vadd.s32 %v175, 16
    %v240 = vsel %vm208, %v224, %v70
    %v241 = vsel %vm209, %v225, %v77
    %v242 = vsel %vm210, %v226, %v84
    %v243 = vsel %vm211, %v227, %v91
    %v244 = vsel %vm212, %v228, %v98
    %v245 = vsel %vm213, %v229, %v105
    %v246 = vsel %vm214, %v230, %v112
    %v247 = vsel %vm215, %v231, %v119
    %v248 = vsel %vm216, %v232, %v126
    %v249 = vsel %vm217, %v233, %v133
    %v250 = vsel %vm218, %v234, %v140
    %v251 = vsel %vm219, %v235, %v147
    %v252 = vsel %vm220, %v236, %v154
    %v253 = vsel %vm221, %v237, %v161
    %v254 = vsel %vm222, %v238, %v168
    %v255 = vsel %vm223, %v239, %v175
    %v256 = vlaneseq
    %v257 = vand.u32 %v256, 127
    %vm258 = vcmp.lt.s32.totalorder %v257, 0
    %v259 = vsub.s32 0, %v257
    %v260 = vsel %vm258, %v259, %v257
    %v261 = vshrl.u32 %v260, 4
    %v262 = vand.u32 %v260, 15
    %v263 = vsub.s32 0, %v262
    %v264 = vsel %vm258, %v263, %v262
    %vm265 = vcmp.ne.s32.totalorder %v264, 0
    %vm266 = vcmp.lt.s32.totalorder %v264, 0
    %vm267 = vmand %vm266, %vm265
    %v268 = vadd.s32 %v264, 16
    %v269 = vsel %vm267, %v268, %v264
    %vm270 = vcmp.eq.s32.totalorder %v240, %v269
    %vm271 = vcmp.eq.s32.totalorder %v241, %v269
    %vm272 = vcmp.eq.s32.totalorder %v242, %v269
    %vm273 = vcmp.eq.s32.totalorder %v243, %v269
    %vm274 = vcmp.eq.s32.totalorder %v244, %v269
    %vm275 = vcmp.eq.s32.totalorder %v245, %v269
    %vm276 = vcmp.eq.s32.totalorder %v246, %v269
    %vm277 = vcmp.eq.s32.totalorder %v247, %v269
    %vm278 = vcmp.eq.s32.totalorder %v248, %v269
    %vm279 = vcmp.eq.s32.totalorder %v249, %v269
    %vm280 = vcmp.eq.s32.totalorder %v250, %v269
    %vm281 = vcmp.eq.s32.totalorder %v251, %v269
    %vm282 = vcmp.eq.s32.totalorder %v252, %v269
    %vm283 = vcmp.eq.s32.totalorder %v253, %v269
    %vm284 = vcmp.eq.s32.totalorder %v254, %v269
    %vm285 = vcmp.eq.s32.totalorder %v255, %v269
    %v286 = vsel %vm270, 1, 0
    %v287 = vsel %vm271, 1, 0
    %v288 = vsel %vm272, 1, 0
    %v289 = vsel %vm273, 1, 0
    %v290 = vsel %vm274, 1, 0
    %v291 = vsel %vm275, 1, 0
    %v292 = vsel %vm276, 1, 0
    %v293 = vsel %vm277, 1, 0
    %v294 = vsel %vm278, 1, 0
    %v295 = vsel %vm279, 1, 0
    %v296 = vsel %vm280, 1, 0
    %v297 = vsel %vm281, 1, 0
    %v298 = vsel %vm282, 1, 0
    %v299 = vsel %vm283, 1, 0
    %v300 = vsel %vm284, 1, 0
    %v301 = vsel %vm285, 1, 0
    %v302 = vcvt.s32.f32 %v286
    %v303 = vcvt.s32.f32 %v287
    %v304 = vcvt.s32.f32 %v288
    %v305 = vcvt.s32.f32 %v289
    %v306 = vcvt.s32.f32 %v290
    %v307 = vcvt.s32.f32 %v291
    %v308 = vcvt.s32.f32 %v292
    %v309 = vcvt.s32.f32 %v293
    %v310 = vcvt.s32.f32 %v294
    %v311 = vcvt.s32.f32 %v295
    %v312 = vcvt.s32.f32 %v296
    %v313 = vcvt.s32.f32 %v297
    %v314 = vcvt.s32.f32 %v298
    %v315 = vcvt.s32.f32 %v299
    %v316 = vcvt.s32.f32 %v300
    %v317 = vcvt.s32.f32 %v301
    %318 = vmatprep.subr.mxu0 0.0
    %319 = vmatpush1.msra.mxu0 %v302
    %320 = vmatprep.subr.mxu0 0.0
    %321 = vmatpush1.msra.mxu0 %v303
    %322 = vmatprep.subr.mxu0 0.0
    %323 = vmatpush1.msra.mxu0 %v304
    %324 = vmatprep.subr.mxu0 0.0
    %325 = vmatpush1.msra.mxu0 %v305
    %326 = vmatprep.subr.mxu0 0.0
    %327 = vmatpush1.msra.mxu0 %v306
    %328 = vmatprep.subr.mxu0 0.0
    %329 = vmatpush1.msra.mxu0 %v307
    %330 = vmatprep.subr.mxu0 0.0
    %331 = vmatpush1.msra.mxu0 %v308
    %332 = vmatprep.subr.mxu0 0.0
    %333 = vmatpush1.msra.mxu0 %v309
    %334 = vmatprep.subr.mxu0 0.0
    %335 = vmatpush1.msra.mxu0 %v310
    %336 = vmatprep.subr.mxu0 0.0
    %337 = vmatpush1.msra.mxu0 %v311
    %338 = vmatprep.subr.mxu0 0.0
    %339 = vmatpush1.msra.mxu0 %v312
    %340 = vmatprep.subr.mxu0 0.0
    %341 = vmatpush1.msra.mxu0 %v313
    %342 = vmatprep.subr.mxu0 0.0
    %343 = vmatpush1.msra.mxu0 %v314
    %344 = vmatprep.subr.mxu0 0.0
    %345 = vmatpush1.msra.mxu0 %v315
    %346 = vmatprep.subr.mxu0 0.0
    %347 = vmatpush1.msra.mxu0 %v316
    %348 = vmatprep.subr.mxu0 0.0
    %349 = vmatpush1.msra.mxu0 %v317
    %350 = vmatprep.subr.mxu0 0.0
    %351 = vmatpush1.msra.mxu0 0.0
    %352 = vmatprep.subr.mxu0 0.0
    %353 = vmatpush1.msra.mxu0 0.0
    %354 = vmatprep.subr.mxu0 0.0
    %355 = vmatpush1.msra.mxu0 0.0
    %356 = vmatprep.subr.mxu0 0.0
    %357 = vmatpush1.msra.mxu0 0.0
    %358 = vmatprep.subr.mxu0 0.0
    %359 = vmatpush1.msra.mxu0 0.0
    %360 = vmatprep.subr.mxu0 0.0
    %361 = vmatpush1.msra.mxu0 0.0
    %362 = vmatprep.subr.mxu0 0.0
    %363 = vmatpush1.msra.mxu0 0.0
    %364 = vmatprep.subr.mxu0 0.0
    %365 = vmatpush1.msra.mxu0 0.0
    %366 = vmatprep.subr.mxu0 0.0
    %367 = vmatpush1.msra.mxu0 0.0
    %368 = vmatprep.subr.mxu0 0.0
    %369 = vmatpush1.msra.mxu0 0.0
    %370 = vmatprep.subr.mxu0 0.0
    %371 = vmatpush1.msra.mxu0 0.0
    %372 = vmatprep.subr.mxu0 0.0
    %373 = vmatpush1.msra.mxu0 0.0
    %374 = vmatprep.subr.mxu0 0.0
    %375 = vmatpush1.msra.mxu0 0.0
    %376 = vmatprep.subr.mxu0 0.0
    %377 = vmatpush1.msra.mxu0 0.0
    %378 = vmatprep.subr.mxu0 0.0
    %379 = vmatpush1.msra.mxu0 0.0
    %380 = vmatprep.subr.mxu0 0.0
    %381 = vmatpush1.msra.mxu0 0.0
    %382 = vmatprep.mubr.f32.mxu0 0.0
    %383 = vmatmul.mubr.f32.gmra.mrb[0].mxu0 %v37
    %v384 = vpop.f32.mrb[0].mxu0
    %v385 = vadd.f32 0.0, %v384
    %v386 = vpop.f32.mrb[0].mxu0
    %387 = vdwg.mxu0
    %388 = vmatprep.subr.mxu0 0.0
    %389 = vmatpush1.msra.mxu0 %v302
    %390 = vmatprep.subr.mxu0 0.0
    %391 = vmatpush1.msra.mxu0 %v303
    %392 = vmatprep.subr.mxu0 0.0
    %393 = vmatpush1.msra.mxu0 %v304
    %394 = vmatprep.subr.mxu0 0.0
    %395 = vmatpush1.msra.mxu0 %v305
    %396 = vmatprep.subr.mxu0 0.0
    %397 = vmatpush1.msra.mxu0 %v306
    %398 = vmatprep.subr.mxu0 0.0
    %399 = vmatpush1.msra.mxu0 %v307
    %400 = vmatprep.subr.mxu0 0.0
    %401 = vmatpush1.msra.mxu0 %v308
    %402 = vmatprep.subr.mxu0 0.0
    %403 = vmatpush1.msra.mxu0 %v309
    %404 = vmatprep.subr.mxu0 0.0
    %405 = vmatpush1.msra.mxu0 %v310
    %406 = vmatprep.subr.mxu0 0.0
    %407 = vmatpush1.msra.mxu0 %v311
    %408 = vmatprep.subr.mxu0 0.0
    %409 = vmatpush1.msra.mxu0 %v312
    %410 = vmatprep.subr.mxu0 0.0
    %411 = vmatpush1.msra.mxu0 %v313
    %412 = vmatprep.subr.mxu0 0.0
    %413 = vmatpush1.msra.mxu0 %v314
    %414 = vmatprep.subr.mxu0 0.0
    %415 = vmatpush1.msra.mxu0 %v315
    %416 = vmatprep.subr.mxu0 0.0
    %417 = vmatpush1.msra.mxu0 %v316
    %418 = vmatprep.subr.mxu0 0.0
    %419 = vmatpush1.msra.mxu0 %v317
    %420 = vmatprep.subr.mxu0 0.0
    %421 = vmatpush1.msra.mxu0 0.0
    %422 = vmatprep.subr.mxu0 0.0
    %423 = vmatpush1.msra.mxu0 0.0
    %424 = vmatprep.subr.mxu0 0.0
    %425 = vmatpush1.msra.mxu0 0.0
    %426 = vmatprep.subr.mxu0 0.0
    %427 = vmatpush1.msra.mxu0 0.0
    %428 = vmatprep.subr.mxu0 0.0
    %429 = vmatpush1.msra.mxu0 0.0
    %430 = vmatprep.subr.mxu0 0.0
    %431 = vmatpush1.msra.mxu0 0.0
    %432 = vmatprep.subr.mxu0 0.0
    %433 = vmatpush1.msra.mxu0 0.0
    %434 = vmatprep.subr.mxu0 0.0
    %435 = vmatpush1.msra.mxu0 0.0
    %436 = vmatprep.subr.mxu0 0.0
    %437 = vmatpush1.msra.mxu0 0.0
    %438 = vmatprep.subr.mxu0 0.0
    %439 = vmatpush1.msra.mxu0 0.0
    %440 = vmatprep.subr.mxu0 0.0
    %441 = vmatpush1.msra.mxu0 0.0
    %442 = vmatprep.subr.mxu0 0.0
    %443 = vmatpush1.msra.mxu0 0.0
    %444 = vmatprep.subr.mxu0 0.0
    %445 = vmatpush1.msra.mxu0 0.0
    %446 = vmatprep.subr.mxu0 0.0
    %447 = vmatpush1.msra.mxu0 0.0
    %448 = vmatprep.subr.mxu0 0.0
    %449 = vmatpush1.msra.mxu0 0.0
    %450 = vmatprep.subr.mxu0 0.0
    %451 = vmatpush1.msra.mxu0 0.0
    %452 = vmatprep.mubr.f32.mxu0 0.0
    %453 = vmatmul.mubr.f32.gmra.mrb[0].mxu0 %v46
    %v454 = vpop.f32.mrb[0].mxu0
    %v455 = vadd.f32 0.0, %v454
    %v456 = vpop.f32.mrb[0].mxu0
    %457 = vdwg.mxu0
    %v458 = vmul.f32 %v385, 0.0078125
    %v459 = vmul.f32 %v455, 0.0078125
    %v460 = vmul.f32 %v458, %v458
    %v461 = vsub.f32 %v459, %v460
    %v462 = vmax.f32 %v461, 0.0
    %v463 = vadd.f32 %v462, 1e-05
    %v464 = vrsqrt.pop %v463
    %v465 = vld [vmem:[%s1] sm:$0x1]
    %v466 = vmul.f32 %v465, %v464
    %v467 = vld [vmem:[%s2] sm:$0x1]
    %v468 = vmul.f32 %v458, %v466
    %v469 = vsub.f32 %v467, %v468
    %v471 = vlaneseq
    %v472 = vshrl.u32 %v471, 7
    %v473 = vsub.s32 0, %v472
    %v474 = vrot.slane %v466, %v473
    %v476 = vmul.f32 %v29, %v474
    %v477 = vmul.f32 %v30, %v474
    %v479 = vlaneseq
    %v480 = vshrl.u32 %v479, 7
    %v481 = vsub.s32 0, %v480
    %v482 = vrot.slane %v469, %v481
    %v484 = vadd.f32 %v476, %v482
    %v485 = vadd.f32 %v477, %v482
    %486 = vst [vmem:[#allocation5] sm:$0xff] %v484
    %487 = vst [vmem:[#allocation5 + $0x8] sm:$0xff] %v485
    // Predicated region
    $region18: #{tpu_custom_call.1} parent=1 // pred_check
      _
    $region19: #{tpu_custom_call.1} parent=1 // pred_check_branch
      %489 = sbr.rel (0) target = $region21
    $region20: #{tpu_custom_call.1} parent=1 // pred_region
      %s491 = ssub.s32 256, 256
      %492 = vsyncadd [#allocation4], %s491
      %s493 = sshll.u32 [#allocation5], 4
      %s494 = int_to_ptr.vmem [resolvable:$true] %s493
      %499 = dma.vmem_to_hbm [thread:$0]  %s494, 256, %s3, [#allocation4], 128, 128, 8
    $region21: #{tpu_custom_call.1} parent=1 // pred_fallthru
      _
    // Predicated region
    $region22: #{tpu_custom_call.1} parent=1 // pred_check
      _
    $region23: #{tpu_custom_call.1} parent=1 // pred_check_branch
      %501 = sbr.rel (0) target = $region25
    $region24: #{tpu_custom_call.1} parent=1 // pred_region
      %502 = dma.done [#allocation4], 256
    $region25: #{tpu_custom_call.1} parent=1 // pred_fallthru
      _
    %503 = vsyncpa [#allocation3], 1
    %504 = vsyncpa [#allocation4], 1

</llo_original>
